<compile_context>
chip_gen: v6e
topology: v6e:2x2x1
jax: 0.10.0
libtpu: 0.0.40
codegen_flags: <defaults>
</compile_context>

<pallas_src>
import jax
import jax.numpy as jnp
from jax.experimental import pallas as pl
from jax.experimental.pallas import tpu as pltpu

HIDDEN = 64
N_PAD = 128          # lane-dense padded width of the folded q-head
MAX_TB = 1024        # batch-tile cap


def _round_up(n, m):
    return ((n + m - 1) // m) * m


def _choose_batch_tile(B):
    """Batch tile: multiple of 16 (bf16 sublane packing), capped at MAX_TB;
    for large single-tile batches split into >= 2 grid steps (v7x megacore)."""
    tb = _round_up(B, 16)
    if tb > MAX_TB:
        return MAX_TB
    if B >= 256:
        tb = _round_up((B + 1) // 2, 16)
    return tb


def dual_dqn_kernel(x_ref, w1_ref, b1_ref, w2_ref, b2_ref, wq_ref, bq_ref,
                    o_ref):
    # fc1 + relu  (bf16 MXU operands, f32 accumulation; bias/relu in f32)
    h = jnp.dot(x_ref[...], w1_ref[...], preferred_element_type=jnp.float32)
    h = jnp.maximum(h + b1_ref[...], 0.0)
    # fc2 + relu
    h = jnp.dot(h.astype(jnp.bfloat16), w2_ref[...],
                preferred_element_type=jnp.float32)
    h = jnp.maximum(h + b2_ref[...], 0.0)
    # folded dueling q-head: q = h @ Wq + bq  (val / adv / mean pre-folded)
    q = jnp.dot(h.astype(jnp.bfloat16), wq_ref[...],
                preferred_element_type=jnp.float32) + bq_ref[...]
    o_ref[...] = q.astype(o_ref.dtype)


def dual_dqn_forward(x, params, n_actions=2):
    """x: (B, 4, FRAME_STACK) float32 -> (B, n_actions) float32."""
    w1, b1, w2, b2, wadv, badv, wval, bval = params

    B = x.shape[0]
    x_flat = x.reshape(B, -1)                  # flatten(start_dim=1)
    K = x_flat.shape[1]

    # -- fold the dueling combine into a single q-head (exact: linear in h) --
    wq = wadv - jnp.mean(wadv, axis=1, keepdims=True) + wval     # (64, A)
    bq = badv - jnp.mean(badv, axis=1, keepdims=True) + bval     # (1,  A)
    # lane-dense 128-wide pad -> full unmasked (TB, 128) stores in the kernel
    wq_p = jnp.zeros((HIDDEN, N_PAD), jnp.float32).at[:, :n_actions].set(wq)
    bq_p = jnp.zeros((1, N_PAD), jnp.float32).at[:, :n_actions].set(bq)

    # -- bf16 MXU operands (f32 accumulation inside the kernel) --------------
    x_bf = x_flat.astype(jnp.bfloat16)
    w1_bf = w1.astype(jnp.bfloat16)
    w2_bf = w2.astype(jnp.bfloat16)
    wq_bf = wq_p.astype(jnp.bfloat16)

    # -- batch tiling ---------------------------------------------------------
    TB = _choose_batch_tile(B)
    B_pad = _round_up(B, TB)
    if B_pad != B:
        x_bf = jnp.pad(x_bf, ((0, B_pad - B), (0, 0)))
    grid = (B_pad // TB,)

    batch_spec = lambda cols: pl.BlockSpec((TB, cols), lambda i: (i, 0))
    # constant index_map -> same block every step, stays VMEM-resident
    resident = lambda arr: pl.BlockSpec(arr.shape, lambda i: (0, 0))

    weight_bytes = (2 * (K * HIDDEN + HIDDEN * HIDDEN + HIDDEN * N_PAD)  # bf16
                    + 4 * (2 * HIDDEN + N_PAD))                          # f32 biases
    cost = pl.CostEstimate(
        flops=2 * B_pad * (K * HIDDEN + HIDDEN * HIDDEN + HIDDEN * N_PAD),
        transcendentals=0,
        bytes_accessed=2 * B_pad * (K + N_PAD) + weight_bytes,            # bf16 x / q
    )

    q_pad = pl.pallas_call(
        dual_dqn_kernel,
        out_shape=jax.ShapeDtypeStruct((B_pad, N_PAD), jnp.bfloat16),
        grid=grid,
        in_specs=[
            batch_spec(K),
            resident(w1_bf), resident(b1),
            resident(w2_bf), resident(b2),
            resident(wq_bf), resident(bq_p),
        ],
        out_specs=batch_spec(N_PAD),
        compiler_params=pltpu.CompilerParams(
            dimension_semantics=("parallel",)),
        cost_estimate=cost,
    )(x_bf, w1_bf, b1, w2_bf, b2, wq_bf, bq_p)

    return q_pad[:B, :n_actions].astype(jnp.float32)


def init_params(key, frame_stack=4, n_actions=2):
    """Deterministic PyTorch-style (Kaiming-uniform) init; weights kept (in, out)."""
    dims = [(4 * frame_stack, HIDDEN),   # fc1
            (HIDDEN, HIDDEN),            # fc2
            (HIDDEN, n_actions),         # fc_adv
            (HIDDEN, 1)]                 # fc_val
    params = []
    for fan_in, fan_out in dims:
        kw, kb, key = jax.random.split(key, 3)
        bound = 1.0 / (fan_in ** 0.5)
        w = jax.random.uniform(kw, (fan_in, fan_out), jnp.float32, -bound, bound)
        b = jax.random.uniform(kb, (1, fan_out), jnp.float32, -bound, bound)
        params += [w, b]
    return tuple(params)


if __name__ == "__main__":
    key = jax.random.PRNGKey(0)
    kx, kp = jax.random.split(key)

    B, C, FRAME_STACK, N_ACTIONS = 2, 4, 4, 2
    x = jax.random.normal(kx, (B, C, FRAME_STACK), jnp.float32)
    params = init_params(kp, frame_stack=FRAME_STACK, n_actions=N_ACTIONS)

    out = dual_dqn_forward(x, params, n_actions=N_ACTIONS)
    out = jax.block_until_ready(out)

    # Pure-JAX f32 reference (unfolded dueling head)
    w1, b1, w2, b2, wadv, badv, wval, bval = params
    xf = x.reshape(B, -1)
    h = jnp.maximum(xf @ w1 + b1, 0.0)
    h = jnp.maximum(h @ w2 + b2, 0.0)
    adv = h @ wadv + badv
    val = h @ wval + bval
    ref = val + adv - adv.mean(axis=1, keepdims=True)

    assert out.shape == (B, N_ACTIONS)
    # bf16 MXU operands + bf16 output -> loosened tolerance vs f32 reference.
    assert jnp.allclose(out, ref, atol=5e-2, rtol=5e-2), (
        f"max abs diff {jnp.max(jnp.abs(out - ref))}")

    print("KERNEL_OK")
</pallas_src>

<mosaic_0001>
module attributes {stable_mosaic.version = 11 : i64} {
  func.func @dual_dqn_kernel(%arg0: i32, %arg1: memref<16x16xbf16, #tpu.memory_space<vmem>>, %arg2: memref<16x64xbf16, #tpu.memory_space<vmem>>, %arg3: memref<1x64xf32, #tpu.memory_space<vmem>>, %arg4: memref<64x64xbf16, #tpu.memory_space<vmem>>, %arg5: memref<1x64xf32, #tpu.memory_space<vmem>>, %arg6: memref<64x128xbf16, #tpu.memory_space<vmem>>, %arg7: memref<1x128xf32, #tpu.memory_space<vmem>>, %arg8: memref<16x128xbf16, #tpu.memory_space<vmem>>) attributes {dimension_semantics = [#tpu.dimension_semantics<parallel>], iteration_bounds = array<i64: 1>, scalar_prefetch = 0 : i64, scratch_operands = 0 : i64, tpu.core_type = #tpu.core_type<tc>, window_params = [{transform_indices = @transform_0, window_bounds = array<i64: 16, 16>}, {pipeline_mode = #tpu.pipeline_mode<synchronous>, transform_indices = @transform_1, window_bounds = array<i64: 16, 64>}, {pipeline_mode = #tpu.pipeline_mode<synchronous>, transform_indices = @transform_2, window_bounds = array<i64: 1, 64>}, {pipeline_mode = #tpu.pipeline_mode<synchronous>, transform_indices = @transform_3, window_bounds = array<i64: 64, 64>}, {pipeline_mode = #tpu.pipeline_mode<synchronous>, transform_indices = @transform_4, window_bounds = array<i64: 1, 64>}, {pipeline_mode = #tpu.pipeline_mode<synchronous>, transform_indices = @transform_5, window_bounds = array<i64: 64, 128>}, {pipeline_mode = #tpu.pipeline_mode<synchronous>, transform_indices = @transform_6, window_bounds = array<i64: 1, 128>}, {transform_indices = @transform_7, window_bounds = array<i64: 16, 128>}]} {
    %c0 = arith.constant 0 : index
    %c0_0 = arith.constant 0 : index
    %0 = vector.load %arg1[%c0, %c0_0] : memref<16x16xbf16, #tpu.memory_space<vmem>>, vector<16x16xbf16>
    %c0_1 = arith.constant 0 : index
    %c0_2 = arith.constant 0 : index
    %1 = vector.load %arg2[%c0_1, %c0_2] : memref<16x64xbf16, #tpu.memory_space<vmem>>, vector<16x64xbf16>
    %cst = arith.constant dense<0.000000e+00> : vector<16x64xf32>
    %2 = tpu.matmul %0, %1, %cst {dimension_numbers = #tpu.dot_dimension_numbers<[1], [0], [0], [1], [0, 0, 1, 1], [], []>} : vector<16x16xbf16>, vector<16x64xbf16>, vector<16x64xf32> -> vector<16x64xf32>
    %c0_3 = arith.constant 0 : index
    %c0_4 = arith.constant 0 : index
    %3 = vector.load %arg3[%c0_3, %c0_4] : memref<1x64xf32, #tpu.memory_space<vmem>>, vector<1x64xf32>
    %4 = vector.broadcast %3 : vector<1x64xf32> to vector<16x64xf32>
    %5 = arith.addf %2, %4 : vector<16x64xf32>
    %cst_5 = arith.constant 0.000000e+00 : f32
    %6 = vector.broadcast %cst_5 : f32 to vector<16x64xf32>
    %7 = arith.maximumf %5, %6 : vector<16x64xf32>
    %8 = arith.truncf %7 : vector<16x64xf32> to vector<16x64xbf16>
    %c0_6 = arith.constant 0 : index
    %c0_7 = arith.constant 0 : index
    %9 = vector.load %arg4[%c0_6, %c0_7] : memref<64x64xbf16, #tpu.memory_space<vmem>>, vector<64x64xbf16>
    %cst_8 = arith.constant dense<0.000000e+00> : vector<16x64xf32>
    %10 = tpu.matmul %8, %9, %cst_8 {dimension_numbers = #tpu.dot_dimension_numbers<[1], [0], [0], [1], [0, 0, 1, 1], [], []>} : vector<16x64xbf16>, vector<64x64xbf16>, vector<16x64xf32> -> vector<16x64xf32>
    %c0_9 = arith.constant 0 : index
    %c0_10 = arith.constant 0 : index
    %11 = vector.load %arg5[%c0_9, %c0_10] : memref<1x64xf32, #tpu.memory_space<vmem>>, vector<1x64xf32>
    %12 = vector.broadcast %11 : vector<1x64xf32> to vector<16x64xf32>
    %13 = arith.addf %10, %12 : vector<16x64xf32>
    %cst_11 = arith.constant 0.000000e+00 : f32
    %14 = vector.broadcast %cst_11 : f32 to vector<16x64xf32>
    %15 = arith.maximumf %13, %14 : vector<16x64xf32>
    %16 = arith.truncf %15 : vector<16x64xf32> to vector<16x64xbf16>
    %c0_12 = arith.constant 0 : index
    %c0_13 = arith.constant 0 : index
    %17 = vector.load %arg6[%c0_12, %c0_13] : memref<64x128xbf16, #tpu.memory_space<vmem>>, vector<64x128xbf16>
    %cst_14 = arith.constant dense<0.000000e+00> : vector<16x128xf32>
    %18 = tpu.matmul %16, %17, %cst_14 {dimension_numbers = #tpu.dot_dimension_numbers<[1], [0], [0], [1], [0, 0, 1, 1], [], []>} : vector<16x64xbf16>, vector<64x128xbf16>, vector<16x128xf32> -> vector<16x128xf32>
    %c0_15 = arith.constant 0 : index
    %c0_16 = arith.constant 0 : index
    %19 = vector.load %arg7[%c0_15, %c0_16] : memref<1x128xf32, #tpu.memory_space<vmem>>, vector<1x128xf32>
    %20 = vector.broadcast %19 : vector<1x128xf32> to vector<16x128xf32>
    %21 = arith.addf %18, %20 : vector<16x128xf32>
    %22 = arith.truncf %21 : vector<16x128xf32> to vector<16x128xbf16>
    %c0_17 = arith.constant 0 : index
    %c0_18 = arith.constant 0 : index
    %23 = vector.load %arg8[%c0_17, %c0_18] : memref<16x128xbf16, #tpu.memory_space<vmem>>, vector<16x128xbf16>
    tpu.vector_store %arg8[%c0_17, %c0_18], %22 {strides = array<i32>} : memref<16x128xbf16, #tpu.memory_space<vmem>>, vector<16x128xbf16>,
    return
  }
  func.func @transform_0(%arg0: i32) -> (i32, i32) {
    %c0_i32 = arith.constant 0 : i32
    %c0_i32_0 = arith.constant 0 : i32
    return %arg0, %c0_i32 : i32, i32
  }
  func.func @transform_1(%arg0: i32) -> (i32, i32) {
    %c0_i32 = arith.constant 0 : i32
    %c0_i32_0 = arith.constant 0 : i32
    %c0_i32_1 = arith.constant 0 : i32
    return %c0_i32, %c0_i32_0 : i32, i32
  }
  func.func @transform_2(%arg0: i32) -> (i32, i32) {
    %c0_i32 = arith.constant 0 : i32
    %c0_i32_0 = arith.constant 0 : i32
    %c0_i32_1 = arith.constant 0 : i32
    return %c0_i32, %c0_i32_0 : i32, i32
  }
  func.func @transform_3(%arg0: i32) -> (i32, i32) {
    %c0_i32 = arith.constant 0 : i32
    %c0_i32_0 = arith.constant 0 : i32
    %c0_i32_1 = arith.constant 0 : i32
    return %c0_i32, %c0_i32_0 : i32, i32
  }
  func.func @transform_4(%arg0: i32) -> (i32, i32) {
    %c0_i32 = arith.constant 0 : i32
    %c0_i32_0 = arith.constant 0 : i32
    %c0_i32_1 = arith.constant 0 : i32
    return %c0_i32, %c0_i32_0 : i32, i32
  }
  func.func @transform_5(%arg0: i32) -> (i32, i32) {
    %c0_i32 = arith.constant 0 : i32
    %c0_i32_0 = arith.constant 0 : i32
    %c0_i32_1 = arith.constant 0 : i32
    return %c0_i32, %c0_i32_0 : i32, i32
  }
  func.func @transform_6(%arg0: i32) -> (i32, i32) {
    %c0_i32 = arith.constant 0 : i32
    %c0_i32_0 = arith.constant 0 : i32
    %c0_i32_1 = arith.constant 0 : i32
    return %c0_i32, %c0_i32_0 : i32, i32
  }
  func.func @transform_7(%arg0: i32) -> (i32, i32) {
    %c0_i32 = arith.constant 0 : i32
    %c0_i32_0 = arith.constant 0 : i32
    return %arg0, %c0_i32 : i32, i32
  }
}

</mosaic_0001>

<llo_original>
// kernel: tpu_custom_call.1
$region0: #{tpu_custom_call.1}
  #allocation0 [shape = 'u32[]', space=smem, size = 0x4, offset = 0x4, fixed_abs, tag = 'smem constant byte address 0x4 - core index']
  #allocation1 [shape = 'u32[144,128]{1,0:T(1,128)}', space=vmem, size = 0x12000, scoped, tag = 'internal scratch']
  %s0 = inlined_call_operand.hbm [shape: bf16[16,16], index: 0, kind: input, shape index: {}]
  %s1 = inlined_call_operand.hbm [shape: bf16[16,64], index: 1, kind: input, shape index: {}]
  %s2 = inlined_call_operand.vmem [shape: f32[1,64], index: 2, kind: input, shape index: {}]
  %s3 = inlined_call_operand.hbm [shape: bf16[64,64], index: 3, kind: input, shape index: {}]
  %s4 = inlined_call_operand.vmem [shape: f32[1,64], index: 4, kind: input, shape index: {}]
  %s5 = inlined_call_operand.hbm [shape: bf16[64,128], index: 5, kind: input, shape index: {}]
  %s6 = inlined_call_operand.vmem [shape: f32[1,128], index: 6, kind: input, shape index: {}]
  %s7 = inlined_call_operand.hbm [shape: bf16[16,128], index: 7, kind: output, shape index: {}]
  %s8 = sld [smem:[#allocation0]]
  $region54: #{tpu_custom_call.1} parent=0
    _
  %s10 = ssub.s32 1, %s8
  %s11 = scalar_select 0, %s10, %s8
  $region1: #{tpu_custom_call.1} parent=0
    #allocation2 [shape = 'u8[4096]{0}', space=vmem, size = 0x1000, scoped, tag = 'input window, operand 0, single buffered']
    #allocation3 [shape = 's32[1]{0}', space=sflag, size = 0x4, scoped, tag = 'scoped memory for tpu_custom_call.1']
    #allocation4 [shape = 's32[1]{0}', space=sflag, size = 0x4, scoped, tag = 'scoped memory for tpu_custom_call.1']
    #allocation5 [shape = 'u8[4096]{0}', space=vmem, size = 0x1000, scoped, tag = 'input window, operand 1, single buffered']
    #allocation6 [shape = 's32[1]{0}', space=sflag, size = 0x4, scoped, tag = 'scoped memory for tpu_custom_call.1']
    #allocation7 [shape = 'u8[16384]{0}', space=vmem, size = 0x4000, scoped, tag = 'input window, operand 3, single buffered']
    #allocation8 [shape = 'u8[16384]{0}', space=vmem, size = 0x4000, scoped, tag = 'input window, operand 5, single buffered']
    #allocation9 [shape = 's32[1]{0}', space=sflag, size = 0x4, scoped, tag = 'scoped memory for tpu_custom_call.1']
    #allocation10 [shape = 'u8[4096]{0}', space=vmem, size = 0x1000, scoped, tag = 'output window, operand 0, single buffered']
    %12 = vsyncpa [#allocation3], 0
    %13 = vsyncpa [#allocation6], 0
    %14 = vsyncpa [#allocation9], 0
    %15 = vsyncpa [#allocation4], 0
    // Predicated region
    $region2: #{tpu_custom_call.1} parent=1 // pred_check
      _
    $region3: #{tpu_custom_call.1} parent=1 // pred_check_branch
      %17 = sbr.rel (0) target = $region5
    $region4: #{tpu_custom_call.1} parent=1 // pred_region
      %s19 = ssub.s32 128, 128
      %20 = vsyncadd [#allocation3], %s19
      %s21 = sshll.u32 [#allocation2], 4
      %s22 = int_to_ptr.vmem [resolvable:$true] %s21
      %27 = dma.hbm_to_vmem [thread:$0]  %s0, 128, %s22, [#allocation3], 64, 64, 4
    $region5: #{tpu_custom_call.1} parent=1 // pred_fallthru
      _
    // Predicated region
    $region6: #{tpu_custom_call.1} parent=1 // pred_check
      _
    $region7: #{tpu_custom_call.1} parent=1 // pred_check_branch
      %29 = sbr.rel (0) target = $region9
    $region8: #{tpu_custom_call.1} parent=1 // pred_region
      %s31 = ssub.s32 128, 128
      %32 = vsyncadd [#allocation6], %s31
      %s33 = sshll.u32 [#allocation5], 4
      %s34 = int_to_ptr.vmem [resolvable:$true] %s33
      %39 = dma.hbm_to_vmem [thread:$0]  %s1, 128, %s34, [#allocation6], 64, 64, 4
    $region9: #{tpu_custom_call.1} parent=1 // pred_fallthru
      _
    // Predicated region
    $region10: #{tpu_custom_call.1} parent=1 // pred_check
      _
    $region11: #{tpu_custom_call.1} parent=1 // pred_check_branch
      %41 = sbr.rel (0) target = $region13
    $region12: #{tpu_custom_call.1} parent=1 // pred_region
      _
    $region13: #{tpu_custom_call.1} parent=1 // pred_fallthru
      _
    // Predicated region
    $region14: #{tpu_custom_call.1} parent=1 // pred_check
      _
    $region15: #{tpu_custom_call.1} parent=1 // pred_check_branch
      %43 = sbr.rel (0) target = $region17
    $region16: #{tpu_custom_call.1} parent=1 // pred_region
      %s45 = ssub.s32 512, 512
      %46 = vsyncadd [#allocation6], %s45
      %s47 = sshll.u32 [#allocation7], 4
      %s48 = int_to_ptr.vmem [resolvable:$true] %s47
      %53 = dma.hbm_to_vmem [thread:$0]  %s3, 512, %s48, [#allocation6], 64, 64, 4
    $region17: #{tpu_custom_call.1} parent=1 // pred_fallthru
      _
    // Predicated region
    $region18: #{tpu_custom_call.1} parent=1 // pred_check
      _
    $region19: #{tpu_custom_call.1} parent=1 // pred_check_branch
      %55 = sbr.rel (0) target = $region21
    $region20: #{tpu_custom_call.1} parent=1 // pred_region
      _
    $region21: #{tpu_custom_call.1} parent=1 // pred_fallthru
      _
    // Predicated region
    $region22: #{tpu_custom_call.1} parent=1 // pred_check
      _
    $region23: #{tpu_custom_call.1} parent=1 // pred_check_branch
      %57 = sbr.rel (0) target = $region25
    $region24: #{tpu_custom_call.1} parent=1 // pred_region
      %s59 = ssub.s32 512, 512
      %60 = vsyncadd [#allocation9], %s59
      %s61 = sshll.u32 [#allocation8], 4
      %s62 = int_to_ptr.vmem [resolvable:$true] %s61
      %67 = dma.hbm_to_vmem [thread:$0]  %s5, 512, %s62, [#allocation9], 64, 64, 4
    $region25: #{tpu_custom_call.1} parent=1 // pred_fallthru
      _
    // Predicated region
    $region26: #{tpu_custom_call.1} parent=1 // pred_check
      _
    $region27: #{tpu_custom_call.1} parent=1 // pred_check_branch
      %69 = sbr.rel (0) target = $region29
    $region28: #{tpu_custom_call.1} parent=1 // pred_region
      _
    $region29: #{tpu_custom_call.1} parent=1 // pred_fallthru
      _
    // Predicated region
    $region30: #{tpu_custom_call.1} parent=1 // pred_check
      _
    $region31: #{tpu_custom_call.1} parent=1 // pred_check_branch
      %71 = sbr.rel (0) target = $region33
    $region32: #{tpu_custom_call.1} parent=1 // pred_region
      %72 = dma.done [#allocation3], 128
    $region33: #{tpu_custom_call.1} parent=1 // pred_fallthru
      _
    // Predicated region
    $region34: #{tpu_custom_call.1} parent=1 // pred_check
      _
    $region35: #{tpu_custom_call.1} parent=1 // pred_check_branch
      %74 = sbr.rel (0) target = $region37
    $region36: #{tpu_custom_call.1} parent=1 // pred_region
      %75 = dma.done [#allocation6], 128
    $region37: #{tpu_custom_call.1} parent=1 // pred_fallthru
      _
    // Predicated region
    $region38: #{tpu_custom_call.1} parent=1 // pred_check
      _
    $region39: #{tpu_custom_call.1} parent=1 // pred_check_branch
      %77 = sbr.rel (0) target = $region41
    $region40: #{tpu_custom_call.1} parent=1 // pred_region
      %78 = dma.done [#allocation6], 512
    $region41: #{tpu_custom_call.1} parent=1 // pred_fallthru
      _
    // Predicated region
    $region42: #{tpu_custom_call.1} parent=1 // pred_check
      _
    $region43: #{tpu_custom_call.1} parent=1 // pred_check_branch
      %80 = sbr.rel (0) target = $region45
    $region44: #{tpu_custom_call.1} parent=1 // pred_region
      %81 = dma.done [#allocation9], 512
    $region45: #{tpu_custom_call.1} parent=1 // pred_fallthru
      _
    %v83 = vld [vmem:[#allocation2] sm:$0xf]
    %v84 = vld [vmem:[#allocation2 + $0x4] sm:$0xf]
    %v85 = vld [vmem:[#allocation5] sm:$0xf]
    %v86 = vld [vmem:[#allocation5 + $0x4] sm:$0xf]
    %v87 = vld [vmem:[%s2] sm:$0x1]
    %v89 = vlaneseq
    %v90 = vshrl.u32 %v89, 7
    %v91 = vsub.s32 0, %v90
    %v92 = vrot.slane %v87, %v91
    %v96 = vunpack.c.l.b16 %v83
    %v97 = vunpack.c.l.b16 %v84
    %v98 = vpack.c.b16 %v97, %v96
    %v101 = vunpack.c.l.b16 %v85
    %v102 = vunpack.c.l.b16 %v86
    %v103 = vpack.c.b16 %v102, %v101
    %vm105 = vcmask 130048
    %v107 = vsel %vm105, %v98, 0
    %109 = vmatprep.subr.bf16.mxu0 0
    %110 = vmatpush1.bf16.msra.mxu0 0
    %111 = vmatprep.subr.bf16.mxu0 0
    %112 = vmatpush1.bf16.msra.mxu0 0
    %113 = vmatprep.subr.bf16.mxu0 0
    %114 = vmatpush1.bf16.msra.mxu0 0
    %115 = vmatprep.subr.bf16.mxu0 0
    %116 = vmatpush1.bf16.msra.mxu0 0
    %117 = vmatprep.subr.bf16.mxu0 0
    %118 = vmatpush1.bf16.msra.mxu0 0
    %119 = vmatprep.subr.bf16.mxu0 0
    %120 = vmatpush1.bf16.msra.mxu0 0
    %121 = vmatprep.subr.bf16.mxu0 0
    %122 = vmatpush1.bf16.msra.mxu0 0
    %123 = vmatprep.subr.bf16.mxu0 0
    %124 = vmatpush1.bf16.msra.mxu0 %v103
    %125 = vmatprep.subr.bf16.mxu0 0
    %126 = vmatpush2.bf16.msra.mxu0 0
    %127 = vmatprep.subr.bf16.mxu0 0
    %128 = vmatpush2.bf16.msra.mxu0 0
    %129 = vmatprep.subr.bf16.mxu0 0
    %130 = vmatpush2.bf16.msra.mxu0 0
    %131 = vmatprep.subr.bf16.mxu0 0
    %132 = vmatpush2.bf16.msra.mxu0 0
    %133 = vmatprep.subr.bf16.mxu0 0
    %134 = vmatpush2.bf16.msra.mxu0 0
    %135 = vmatprep.subr.bf16.mxu0 0
    %136 = vmatpush2.bf16.msra.mxu0 0
    %137 = vmatprep.subr.bf16.mxu0 0
    %138 = vmatpush2.bf16.msra.mxu0 0
    %139 = vmatprep.subr.bf16.mxu0 0
    %140 = vmatpush2.bf16.msra.mxu0 0
    %141 = vmatprep.mubr.bf16.mxu0 0
    %142 = vmatmul.mubr.bf16.gmra.mxu0 %v107
    %v143 = vpop.f32.mrf.mxu0
    %v144 = vadd.f32 %v92, %v143
    %v145 = vpop.f32.mrf.mxu0
    %v146 = vpop.f32.mrf.mxu0
    %v147 = vadd.f32 %v92, %v146
    %v148 = vpop.f32.mrf.mxu0
    %149 = vdwg.mxu0
    %v150 = vmax.f32 %v144, 0.0
    %v151 = vmax.f32 %v147, 0.0
    %v152 = vpack.c.bf16 %v151, %v150
    %v153 = vld [vmem:[#allocation7] sm:$0xf]
    %v154 = vld [vmem:[#allocation7 + $0x4] sm:$0xf]
    %v155 = vld [vmem:[#allocation7 + $0x8] sm:$0xf]
    %v156 = vld [vmem:[#allocation7 + $0xc] sm:$0xf]
    %v157 = vld [vmem:[#allocation7 + $0x10] sm:$0xf]
    %v158 = vld [vmem:[#allocation7 + $0x14] sm:$0xf]
    %v159 = vld [vmem:[#allocation7 + $0x18] sm:$0xf]
    %v160 = vld [vmem:[#allocation7 + $0x1c] sm:$0xf]
    %v161 = vld [vmem:[%s4] sm:$0x1]
    %v163 = vlaneseq
    %v164 = vshrl.u32 %v163, 7
    %v165 = vsub.s32 0, %v164
    %v166 = vrot.slane %v161, %v165
    %v176 = vunpack.c.l.b16 %v153
    %v177 = vunpack.c.l.b16 %v154
    %v178 = vunpack.c.l.b16 %v155
    %v179 = vunpack.c.l.b16 %v156
    %v180 = vunpack.c.l.b16 %v157
    %v181 = vunpack.c.l.b16 %v158
    %v182 = vunpack.c.l.b16 %v159
    %v183 = vunpack.c.l.b16 %v160
    %v184 = vpack.c.b16 %v177, %v176
    %v185 = vpack.c.b16 %v179, %v178
    %v186 = vpack.c.b16 %v181, %v180
    %v187 = vpack.c.b16 %v183, %v182
    %vm192 = vcmask 523264
    %v194 = vsel %vm192, %v152, 0
    %196 = vmatprep.subr.bf16.mxu0 0
    %197 = vmatpush1.bf16.msra.mxu0 0
    %198 = vmatprep.subr.bf16.mxu0 0
    %199 = vmatpush1.bf16.msra.mxu0 0
    %200 = vmatprep.subr.bf16.mxu0 0
    %201 = vmatpush1.bf16.msra.mxu0 0
    %202 = vmatprep.subr.bf16.mxu0 0
    %203 = vmatpush1.bf16.msra.mxu0 0
    %204 = vmatprep.subr.bf16.mxu0 0
    %205 = vmatpush1.bf16.msra.mxu0 %v187
    %206 = vmatprep.subr.bf16.mxu0 0
    %207 = vmatpush1.bf16.msra.mxu0 %v186
    %208 = vmatprep.subr.bf16.mxu0 0
    %209 = vmatpush1.bf16.msra.mxu0 %v185
    %210 = vmatprep.subr.bf16.mxu0 0
    %211 = vmatpush1.bf16.msra.mxu0 %v184
    %212 = vmatprep.subr.bf16.mxu0 0
    %213 = vmatpush2.bf16.msra.mxu0 0
    %214 = vmatprep.subr.bf16.mxu0 0
    %215 = vmatpush2.bf16.msra.mxu0 0
    %216 = vmatprep.subr.bf16.mxu0 0
    %217 = vmatpush2.bf16.msra.mxu0 0
    %218 = vmatprep.subr.bf16.mxu0 0
    %219 = vmatpush2.bf16.msra.mxu0 0
    %220 = vmatprep.subr.bf16.mxu0 0
    %221 = vmatpush2.bf16.msra.mxu0 0
    %222 = vmatprep.subr.bf16.mxu0 0
    %223 = vmatpush2.bf16.msra.mxu0 0
    %224 = vmatprep.subr.bf16.mxu0 0
    %225 = vmatpush2.bf16.msra.mxu0 0
    %226 = vmatprep.subr.bf16.mxu0 0
    %227 = vmatpush2.bf16.msra.mxu0 0
    %228 = vmatprep.mubr.bf16.mxu0 0
    %229 = vmatmul.mubr.bf16.gmra.mxu0 %v194
    %v230 = vpop.f32.mrf.mxu0
    %v231 = vadd.f32 %v166, %v230
    %v232 = vpop.f32.mrf.mxu0
    %v233 = vpop.f32.mrf.mxu0
    %v234 = vadd.f32 %v166, %v233
    %v235 = vpop.f32.mrf.mxu0
    %236 = vdwg.mxu0
    %v237 = vmax.f32 %v231, 0.0
    %v238 = vmax.f32 %v234, 0.0
    %v239 = vpack.c.bf16 %v238, %v237
    %v240 = vld [vmem:[#allocation8] sm:$0xf]
    %v241 = vld [vmem:[#allocation8 + $0x4] sm:$0xf]
    %v242 = vld [vmem:[#allocation8 + $0x8] sm:$0xf]
    %v243 = vld [vmem:[#allocation8 + $0xc] sm:$0xf]
    %v244 = vld [vmem:[#allocation8 + $0x10] sm:$0xf]
    %v245 = vld [vmem:[#allocation8 + $0x14] sm:$0xf]
    %v246 = vld [vmem:[#allocation8 + $0x18] sm:$0xf]
    %v247 = vld [vmem:[#allocation8 + $0x1c] sm:$0xf]
    %v248 = vld [vmem:[%s6] sm:$0x1]
    %v250 = vlaneseq
    %v251 = vshrl.u32 %v250, 7
    %v252 = vsub.s32 0, %v251
    %v253 = vrot.slane %v248, %v252
    %v263 = vunpack.c.l.b16 %v240
    %v264 = vunpack.c.l.b16 %v241
    %v265 = vunpack.c.l.b16 %v242
    %v266 = vunpack.c.l.b16 %v243
    %v267 = vunpack.c.l.b16 %v244
    %v268 = vunpack.c.l.b16 %v245
    %v269 = vunpack.c.l.b16 %v246
    %v270 = vunpack.c.l.b16 %v247
    %v271 = vpack.c.b16 %v264, %v263
    %v272 = vpack.c.b16 %v266, %v265
    %v273 = vpack.c.b16 %v268, %v267
    %v274 = vpack.c.b16 %v270, %v269
    %v280 = vsel %vm192, %v239, 0
    %282 = vmatprep.subr.bf16.mxu0 0
    %283 = vmatpush1.bf16.msra.mxu0 0
    %284 = vmatprep.subr.bf16.mxu0 0
    %285 = vmatpush1.bf16.msra.mxu0 0
    %286 = vmatprep.subr.bf16.mxu0 0
    %287 = vmatpush1.bf16.msra.mxu0 0
    %288 = vmatprep.subr.bf16.mxu0 0
    %289 = vmatpush1.bf16.msra.mxu0 0
    %290 = vmatprep.subr.bf16.mxu0 0
    %291 = vmatpush1.bf16.msra.mxu0 %v274
    %292 = vmatprep.subr.bf16.mxu0 0
    %293 = vmatpush1.bf16.msra.mxu0 %v273
    %294 = vmatprep.subr.bf16.mxu0 0
    %295 = vmatpush1.bf16.msra.mxu0 %v272
    %296 = vmatprep.subr.bf16.mxu0 0
    %297 = vmatpush1.bf16.msra.mxu0 %v271
    %298 = vmatprep.subr.bf16.mxu0 0
    %299 = vmatpush2.bf16.msra.mxu0 0
    %300 = vmatprep.subr.bf16.mxu0 0
    %301 = vmatpush2.bf16.msra.mxu0 0
    %302 = vmatprep.subr.bf16.mxu0 0
    %303 = vmatpush2.bf16.msra.mxu0 0
    %304 = vmatprep.subr.bf16.mxu0 0
    %305 = vmatpush2.bf16.msra.mxu0 0
    %306 = vmatprep.subr.bf16.mxu0 0
    %307 = vmatpush2.bf16.msra.mxu0 0
    %308 = vmatprep.subr.bf16.mxu0 0
    %309 = vmatpush2.bf16.msra.mxu0 0
    %310 = vmatprep.subr.bf16.mxu0 0
    %311 = vmatpush2.bf16.msra.mxu0 0
    %312 = vmatprep.subr.bf16.mxu0 0
    %313 = vmatpush2.bf16.msra.mxu0 0
    %314 = vmatprep.mubr.bf16.mxu0 0
    %315 = vmatmul.mubr.bf16.gmra.mxu0 %v280
    %v316 = vpop.f32.mrf.mxu0
    %v317 = vadd.f32 %v253, %v316
    %v318 = vpop.f32.mrf.mxu0
    %v319 = vpop.f32.mrf.mxu0
    %v320 = vadd.f32 %v253, %v319
    %v321 = vpop.f32.mrf.mxu0
    %322 = vdwg.mxu0
    %v323 = vpack.c.bf16 %v320, %v317
    %v325 = vunpack.c.l.b16 %v323
    %v326 = vunpack.c.h.b16 %v323
    %v327 = vpack.c.b16 %v325, %v325
    %v328 = vpack.c.b16 %v326, %v326
    %331 = vst [vmem:[#allocation10] sm:$0xf] %v327
    %332 = vst [vmem:[#allocation10 + $0x4] sm:$0xf] %v328
    // Predicated region
    $region46: #{tpu_custom_call.1} parent=1 // pred_check
      _
    $region47: #{tpu_custom_call.1} parent=1 // pred_check_branch
      %334 = sbr.rel (0) target = $region49
    $region48: #{tpu_custom_call.1} parent=1 // pred_region
      %s336 = ssub.s32 128, 128
      %337 = vsyncadd [#allocation4], %s336
      %s338 = sshll.u32 [#allocation10], 4
      %s339 = int_to_ptr.vmem [resolvable:$true] %s338
      %344 = dma.vmem_to_hbm [thread:$0]  %s339, 128, %s7, [#allocation4], 64, 64, 4
    $region49: #{tpu_custom_call.1} parent=1 // pred_fallthru
      _
    // Predicated region
    $region50: #{tpu_custom_call.1} parent=1 // pred_check
      _
    $region51: #{tpu_custom_call.1} parent=1 // pred_check_branch
      %346 = sbr.rel (0) target = $region53
    $region52: #{tpu_custom_call.1} parent=1 // pred_region
      %347 = dma.done [#allocation4], 128
    $region53: #{tpu_custom_call.1} parent=1 // pred_fallthru
      _
    %348 = vsyncpa [#allocation3], 1
    %349 = vsyncpa [#allocation6], 1
    %350 = vsyncpa [#allocation9], 1
    %351 = vsyncpa [#allocation4], 1

</llo_original>
